<compile_context>
chip_gen: v5e
topology: v5e:2x2
jax: 0.10.0
libtpu: 0.0.40
codegen_flags: <defaults>
</compile_context>

<pallas_src>
import math

import jax
import jax.numpy as jnp
from jax import lax
from jax.experimental import pallas as pl
from jax.experimental.pallas import tpu as pltpu

GATHER_WIDTH = 128  # lane-dense packed width of the K|V|coord gather table


# --------------------------- KV projection / packing ------------------------

def _make_kv_prep_kernel(tm, C, width):
    two_c = 2 * C

    def kernel(f_ref, c_ref, w_ref, b_ref, o_ref):
        kv = (jnp.dot(f_ref[...], w_ref[...], preferred_element_type=jnp.float32)
              + b_ref[...])                                   # [tm, 2C]
        o_ref[:, 0:two_c] = kv
        o_ref[:, two_c:two_c + 3] = c_ref[...]
        o_ref[:, two_c + 3:] = jnp.zeros((tm, width - two_c - 3), jnp.float32)

    return kernel


def kv_prep(kv_feat, kv_coord, w_kv, b_kv, width=GATHER_WIDTH):
    """Fused K/V projection ([C,2C] matmul) packed with coords into a
    lane-dense [B, Nkv, 128] gather table (full-width stores)."""
    B, N, C = kv_feat.shape
    assert 2 * C + 3 <= width
    rows = B * N
    tm = min(rows, 1024)
    while rows % tm:
        tm //= 2
    assert tm >= 8

    out = pl.pallas_call(
        _make_kv_prep_kernel(tm, C, width),
        out_shape=jax.ShapeDtypeStruct((rows, width), jnp.float32),
        grid=(rows // tm,),
        in_specs=[
            pl.BlockSpec((tm, C), lambda i: (i, 0)),
            pl.BlockSpec((tm, 3), lambda i: (i, 0)),
            pl.BlockSpec((C, 2 * C), lambda i: (0, 0)),
            pl.BlockSpec((1, 2 * C), lambda i: (0, 0)),
        ],
        out_specs=pl.BlockSpec((tm, width), lambda i: (i, 0)),
        compiler_params=pltpu.CompilerParams(dimension_semantics=("parallel",)),
    )(kv_feat.reshape(rows, C), kv_coord.reshape(rows, 3),
      w_kv, b_kv.reshape(1, 2 * C))
    return out.reshape(B, N, width)


# ------------------------ fused KNN attention kernel ------------------------

def _make_attn_kernel(tn, K, Nkv, C, H, width):
    Dh = C // H
    tnK = tn * K
    two_c = 2 * C
    scale = 1.0 / math.sqrt(Dh)

    def kernel(idx_ref, qf_ref, qc_ref, kv_ref,
               wq_ref, bq_ref, wp1_ref, bp1_ref, wp2_ref, bp2_ref,
               wo_ref, bo_ref, o_ref):
        x = qf_ref[0]                          # [tn, C]   query features
        pq = qc_ref[0]                         # [tn, 3]   query coords
        idx = idx_ref[0]                       # [tnK, 1]  flat neighbor indices

        # ---- in-kernel query projection ----
        q = (jnp.dot(x, wq_ref[...], preferred_element_type=jnp.float32)
             + bq_ref[...])                    # [tn, C]

        # ---- expansion / segmented-reduction matrices (built from iota) ----
        # E[r, t] = 1 iff flat row r belongs to query t (r // K == t)
        row_q = lax.broadcasted_iota(jnp.int32, (tnK, tn), 0) // K
        col_q = lax.broadcasted_iota(jnp.int32, (tnK, tn), 1)
        E = (row_q == col_q).astype(jnp.float32)               # [tnK, tn]
        row_t = lax.broadcasted_iota(jnp.int32, (tn, tnK), 0)
        col_r = lax.broadcasted_iota(jnp.int32, (tn, tnK), 1) // K
        E_t = (row_t == col_r).astype(jnp.float32)              # [tn, tnK]

        # ---- one-hot KNN gather via MXU (no HBM-duplicated neighbors) ----
        lane_j = lax.broadcasted_iota(jnp.int32, (tnK, Nkv), 1)
        onehot = (idx == lane_j).astype(jnp.float32)             # [tnK, Nkv]
        k_all = kv_ref[0, :, 0:C]                                # [Nkv, C]
        v_all = kv_ref[0, :, C:two_c]                            # [Nkv, C]
        c_all = kv_ref[0, :, two_c:two_c + 3]                    # [Nkv, 3]
        k_nbr = jnp.dot(onehot, k_all, preferred_element_type=jnp.float32)
        v_nbr = jnp.dot(onehot, v_all, preferred_element_type=jnp.float32)
        n_coord = jnp.dot(onehot, c_all, preferred_element_type=jnp.float32)

        # ---- fused relative positional-encoding MLP ----
        q_coord_e = jnp.dot(E, pq, preferred_element_type=jnp.float32)  # [tnK,3]
        rel = n_coord - q_coord_e
        h1 = jnp.maximum(
            jnp.dot(rel, wp1_ref[...], preferred_element_type=jnp.float32)
            + bp1_ref[...], 0.0)
        pe = (jnp.dot(h1, wp2_ref[...], preferred_element_type=jnp.float32)
              + bp2_ref[...])                                    # [tnK, C]

        kpe = k_nbr + pe
        vpe = v_nbr + pe

        # ---- single-pass multi-head attention (no per-head mask sweeps) ----
        d_id = lax.broadcasted_iota(jnp.int32, (C, H), 0) // Dh
        h_id = lax.broadcasted_iota(jnp.int32, (C, H), 1)
        hsel = (d_id == h_id).astype(jnp.float32)                # [C, H]
        h_id_t = lax.broadcasted_iota(jnp.int32, (H, C), 0)
        d_id_t = lax.broadcasted_iota(jnp.int32, (H, C), 1) // Dh
        hsel_t = (h_id_t == d_id_t).astype(jnp.float32)          # [H, C]

        q_e = jnp.dot(E, q, preferred_element_type=jnp.float32)  # [tnK, C]
        s2 = jnp.dot(q_e * kpe, hsel,
                     preferred_element_type=jnp.float32) * scale  # [tnK, H]

        # numerically-stable softmax over each query's K neighbors, per head
        # (per-tile per-head max is a valid stabilizer; per-group constants
        # cancel in the normalization)
        m = jnp.max(s2, axis=0, keepdims=True)                   # [1, H]
        e2 = jnp.exp(s2 - m)                                     # [tnK, H]
        l = jnp.dot(E_t, e2, preferred_element_type=jnp.float32)  # [tn, H]
        linv = pl.reciprocal(l, approx=True)
        linv_e = jnp.dot(E, linv, preferred_element_type=jnp.float32)  # [tnK,H]
        a2 = e2 * linv_e                                         # [tnK, H]

        # broadcast per-head weights over the Dh lanes of each head via MXU
        a_full = jnp.dot(a2, hsel_t, preferred_element_type=jnp.float32)  # [tnK,C]
        wv = a_full * vpe                                        # [tnK, C]
        attn = jnp.dot(E_t, wv, preferred_element_type=jnp.float32)       # [tn, C]

        out = (jnp.dot(attn, wo_ref[...], preferred_element_type=jnp.float32)
               + bo_ref[...])
        o_ref[0] = x + out                                       # residual

    return kernel


def fused_knn_attention(q_feat, q_coord, kvcat, knn_idx, p, n_heads,
                        max_rows=1024):
    """Fused PointTransformer layer: gather + PE-MLP + attention + Wo + residual."""
    B, Nq, C = q_feat.shape
    Nkv, width = kvcat.shape[1], kvcat.shape[2]
    K = knn_idx.shape[-1]
    assert C % n_heads == 0

    # keep tn * K ~= max_rows so in-kernel temps stay small (spill control)
    tn = max(8, min(Nq, max_rows // K))
    while Nq % tn:
        tn //= 2
    assert tn >= 8 and Nq % tn == 0

    idx_flat = knn_idx.reshape(B, Nq * K, 1)
    kernel = _make_attn_kernel(tn, K, Nkv, C, n_heads, width)

    return pl.pallas_call(
        kernel,
        out_shape=jax.ShapeDtypeStruct((B, Nq, C), jnp.float32),
        grid=(B, Nq // tn),
        in_specs=[
            pl.BlockSpec((1, tn * K, 1), lambda b, i: (b, i, 0)),
            pl.BlockSpec((1, tn, C), lambda b, i: (b, i, 0)),
            pl.BlockSpec((1, tn, 3), lambda b, i: (b, i, 0)),
            pl.BlockSpec((1, Nkv, width), lambda b, i: (b, 0, 0)),
            pl.BlockSpec((C, C), lambda b, i: (0, 0)),
            pl.BlockSpec((1, C), lambda b, i: (0, 0)),
            pl.BlockSpec((3, C), lambda b, i: (0, 0)),
            pl.BlockSpec((1, C), lambda b, i: (0, 0)),
            pl.BlockSpec((C, C), lambda b, i: (0, 0)),
            pl.BlockSpec((1, C), lambda b, i: (0, 0)),
            pl.BlockSpec((C, C), lambda b, i: (0, 0)),
            pl.BlockSpec((1, C), lambda b, i: (0, 0)),
        ],
        out_specs=pl.BlockSpec((1, tn, C), lambda b, i: (b, i, 0)),
        compiler_params=pltpu.CompilerParams(
            dimension_semantics=("parallel", "parallel")),
    )(idx_flat, q_feat, q_coord, kvcat,
      p["Wq"], p["bq"].reshape(1, C),
      p["Wp1"], p["bp1"].reshape(1, C),
      p["Wp2"], p["bp2"].reshape(1, C),
      p["Wo"], p["bo"].reshape(1, C))


# ------------------------------ KNN (distances) -----------------------------

def _pdist_kernel(q_ref, bt_ref, o_ref):
    q = q_ref[0]                                    # [Nq, 3]
    bt = bt_ref[0]                                  # [3, Nb] (transposed coords)
    q2 = jnp.sum(q * q, axis=-1, keepdims=True)     # [Nq, 1]
    b2 = jnp.sum(bt * bt, axis=0, keepdims=True)    # [1, Nb]
    # cross term as 3 VPU outer-product FMAs (keeps the 3-wide contraction
    # off the MXU)
    cross = (q[:, 0:1] * bt[0:1, :]
             + q[:, 1:2] * bt[1:2, :]
             + q[:, 2:3] * bt[2:3, :])              # [Nq, Nb]
    o_ref[0] = q2 + b2 - 2.0 * cross


def pallas_pairwise_sqdist(query_coord, base_coord):
    """Per-batch pairwise squared distances: [B, Nq, Nb]."""
    B, Nq, _ = query_coord.shape
    Nb = base_coord.shape[1]
    base_t = jnp.swapaxes(base_coord, 1, 2)         # [B, 3, Nb]
    return pl.pallas_call(
        _pdist_kernel,
        out_shape=jax.ShapeDtypeStruct((B, Nq, Nb), jnp.float32),
        grid=(B,),
        in_specs=[
            pl.BlockSpec((1, Nq, 3), lambda b: (b, 0, 0)),
            pl.BlockSpec((1, 3, Nb), lambda b: (b, 0, 0)),
        ],
        out_specs=pl.BlockSpec((1, Nq, Nb), lambda b: (b, 0, 0)),
        compiler_params=pltpu.CompilerParams(dimension_semantics=("parallel",)),
    )(query_coord, base_t)


def knn_indices(query_coord, base_coord, k):
    """Per-batch k-NN indices into `base`: [B, Nq, k] int32."""
    d = pallas_pairwise_sqdist(query_coord, base_coord)
    # TODO(synk): top-k selection has no clean Pallas equivalent; done in JAX.
    _, idx = jax.lax.top_k(-d, k)
    return idx.astype(jnp.int32)


# ------------------------------- dual softmax --------------------------------

def pallas_dual_softmax(feat_a, feat_b, temperature=1.0):
    """LoFTR-style dual softmax: conf = softmax_rows(S) * softmax_cols(S),
    S = feat_a @ feat_b^T / temperature. Returns [B, Na, Nb]."""
    B, Na_, C = feat_a.shape
    Nb_ = feat_b.shape[1]
    inv_t = 1.0 / float(temperature)

    def kernel(a_ref, b_ref, o_ref):
        a = a_ref[0]                                           # [Na, C]
        b = b_ref[0]                                           # [Nb, C]
        sim = jax.lax.dot_general(a, b, (((1,), (1,)), ((), ())),
                                  preferred_element_type=jnp.float32) * inv_t
        e_r = jnp.exp(sim - jnp.max(sim, axis=1, keepdims=True))
        sm_r = e_r * pl.reciprocal(jnp.sum(e_r, axis=1, keepdims=True),
                                   approx=True)                # softmax over Nb
        e_c = jnp.exp(sim - jnp.max(sim, axis=0, keepdims=True))
        sm_c = e_c * pl.reciprocal(jnp.sum(e_c, axis=0, keepdims=True),
                                   approx=True)                # softmax over Na
        o_ref[0] = sm_r * sm_c

    # TODO(synk): full [Na, Nb] tile per batch; needs online/two-pass tiling
    # for large point counts.
    return pl.pallas_call(
        kernel,
        out_shape=jax.ShapeDtypeStruct((B, Na_, Nb_), jnp.float32),
        grid=(B,),
        in_specs=[
            pl.BlockSpec((1, Na_, C), lambda b: (b, 0, 0)),
            pl.BlockSpec((1, Nb_, C), lambda b: (b, 0, 0)),
        ],
        out_specs=pl.BlockSpec((1, Na_, Nb_), lambda b: (b, 0, 0)),
        compiler_params=pltpu.CompilerParams(dimension_semantics=("parallel",)),
    )(feat_a, feat_b)


# ------------------------------- glue / model --------------------------------

def point_transformer(p, q_feat, q_coord, kv_feat, kv_coord, knn_idx, n_heads):
    """One PointTransformer attention layer (self-attn if q==kv)."""
    kvcat = kv_prep(kv_feat, kv_coord, p["Wkv"], p["bkv"])
    return fused_knn_attention(q_feat, q_coord, kvcat, knn_idx, p, n_heads)


def point_sam_block(p, tgt_coord, tgt_feat, anc_coord, anc_feat,
                    knn_q2q, knn_q2c, knn_c2q, n_heads):
    # query self-attention
    tgt_feat = point_transformer(p["query_attn"], tgt_feat, tgt_coord,
                                 tgt_feat, tgt_coord, knn_q2q, n_heads)
    # query <- context cross attention
    tgt_feat = point_transformer(p["context_attn"], tgt_feat, tgt_coord,
                                 anc_feat, anc_coord, knn_q2c, n_heads)
    # context <- (updated) query cross attention (shared weights)
    anc_feat = point_transformer(p["context_attn"], anc_feat, anc_coord,
                                 tgt_feat, tgt_coord, knn_c2q, n_heads)
    return tgt_feat, anc_feat


def rigpose_transformer_forward(params, anchor_points, target_points, n_heads):
    anc_coord, anc_feat = anchor_points
    tgt_coord, tgt_feat = target_points

    knn_q2q = knn_indices(tgt_coord, tgt_coord, 16)   # query2query_knn = 16
    knn_q2c = knn_indices(tgt_coord, anc_coord, 64)   # query2context_knn = 64
    knn_c2q = knn_indices(anc_coord, tgt_coord, 64)

    for blk in params["sam_blocks"]:
        tgt_feat, anc_feat = point_sam_block(
            blk, tgt_coord, tgt_feat, anc_coord, anc_feat,
            knn_q2q, knn_q2c, knn_c2q, n_heads)

    conf_matrix = pallas_dual_softmax(tgt_feat, anc_feat,
                                      temperature=params["temperature"])
    return conf_matrix


# --------------------------- deterministic params ---------------------------

def _init_linear(key, fan_in, fan_out):
    bound = 1.0 / math.sqrt(fan_in)
    w = jax.random.uniform(key, (fan_in, fan_out), jnp.float32, -bound, bound)
    b = jnp.zeros((fan_out,), jnp.float32)
    return w, b


def init_point_transformer_params(key, hidden_dim):
    ks = jax.random.split(key, 5)
    Wq, bq = _init_linear(ks[0], hidden_dim, hidden_dim)
    Wkv, bkv = _init_linear(ks[1], hidden_dim, 2 * hidden_dim)   # fused [Wk|Wv]
    Wo, bo = _init_linear(ks[2], hidden_dim, hidden_dim)
    Wp1, bp1 = _init_linear(ks[3], 3, hidden_dim)
    Wp2, bp2 = _init_linear(ks[4], hidden_dim, hidden_dim)
    return dict(Wq=Wq, bq=bq, Wkv=Wkv, bkv=bkv, Wo=Wo, bo=bo,
                Wp1=Wp1, bp1=bp1, Wp2=Wp2, bp2=bp2)


def init_rigpose_params(key, hidden_dim):
    blocks = []
    for _ in range(2):  # RigPoseTransformer has 2 sam_blocks
        key, k1, k2 = jax.random.split(key, 3)
        blocks.append(dict(
            query_attn=init_point_transformer_params(k1, hidden_dim),
            context_attn=init_point_transformer_params(k2, hidden_dim),
        ))
    return dict(sam_blocks=blocks, temperature=1.0)


# ----------------------------------- main ------------------------------------

if __name__ == "__main__":
    B, Nt, Na, C, H = 2, 128, 128, 32, 4   # hidden_dims[0]=32, n_heads[0]=4

    key = jax.random.PRNGKey(0)
    k1, k2, k3, k4, kp = jax.random.split(key, 5)
    target_coord = jax.random.normal(k1, (B, Nt, 3), jnp.float32)
    target_feat = jax.random.normal(k2, (B, Nt, C), jnp.float32)
    anchor_coord = jax.random.normal(k3, (B, Na, 3), jnp.float32)
    anchor_feat = jax.random.normal(k4, (B, Na, C), jnp.float32)

    params = init_rigpose_params(kp, C)

    conf = rigpose_transformer_forward(
        params,
        anchor_points=(anchor_coord, anchor_feat),
        target_points=(target_coord, target_feat),
        n_heads=H,
    )
    conf = jax.block_until_ready(conf)
    assert conf.shape == (B, Nt, Na)
    assert bool(jnp.all(jnp.isfinite(conf)))
    print("KERNEL_OK")
</pallas_src>

<mosaic_0001>
module attributes {stable_mosaic.version = 11 : i64} {
  func.func @_pdist_kernel(%arg0: i32, %arg1: memref<1x128x3xf32, #tpu.memory_space<vmem>>, %arg2: memref<1x3x128xf32, #tpu.memory_space<vmem>>, %arg3: memref<1x128x128xf32, #tpu.memory_space<vmem>>) attributes {dimension_semantics = [#tpu.dimension_semantics<parallel>], iteration_bounds = array<i64: 2>, scalar_prefetch = 0 : i64, scratch_operands = 0 : i64, tpu.core_type = #tpu.core_type<tc>, window_params = [{transform_indices = @transform_0, window_bounds = array<i64: 1, 128, 3>}, {transform_indices = @transform_1, window_bounds = array<i64: 1, 3, 128>}, {transform_indices = @transform_2, window_bounds = array<i64: 1, 128, 128>}]} {
    %c0 = arith.constant 0 : index
    %c0_0 = arith.constant 0 : index
    %c0_1 = arith.constant 0 : index
    %0 = vector.load %arg1[%c0, %c0_0, %c0_1] : memref<1x128x3xf32, #tpu.memory_space<vmem>>, vector<1x128x3xf32>
    %1 = vector.shape_cast %0 : vector<1x128x3xf32> to vector<128x3xf32>
    %c0_2 = arith.constant 0 : index
    %c0_3 = arith.constant 0 : index
    %c0_4 = arith.constant 0 : index
    %2 = vector.load %arg2[%c0_2, %c0_3, %c0_4] : memref<1x3x128xf32, #tpu.memory_space<vmem>>, vector<1x3x128xf32>
    %3 = vector.shape_cast %2 : vector<1x3x128xf32> to vector<3x128xf32>
    %4 = arith.mulf %1, %1 : vector<128x3xf32>
    %cst = arith.constant dense<0.000000e+00> : vector<128xf32>
    %5 = vector.multi_reduction <add>, %4, %cst [1] : vector<128x3xf32> to vector<128xf32>
    %6 = vector.shape_cast %5 : vector<128xf32> to vector<128x1xf32>
    %7 = arith.mulf %3, %3 : vector<3x128xf32>
    %cst_5 = arith.constant dense<0.000000e+00> : vector<128xf32>
    %8 = vector.multi_reduction <add>, %7, %cst_5 [0] : vector<3x128xf32> to vector<128xf32>
    %9 = vector.shape_cast %8 : vector<128xf32> to vector<1x128xf32>
    %10 = vector.extract_strided_slice %1 {offsets = [0, 0], sizes = [128, 1], strides = [1, 1]} : vector<128x3xf32> to vector<128x1xf32>
    %11 = vector.extract_strided_slice %3 {offsets = [0, 0], sizes = [1, 128], strides = [1, 1]} : vector<3x128xf32> to vector<1x128xf32>
    %12 = vector.broadcast %10 : vector<128x1xf32> to vector<128x128xf32>
    %13 = vector.broadcast %11 : vector<1x128xf32> to vector<128x128xf32>
    %14 = arith.mulf %12, %13 : vector<128x128xf32>
    %15 = vector.extract_strided_slice %1 {offsets = [0, 1], sizes = [128, 1], strides = [1, 1]} : vector<128x3xf32> to vector<128x1xf32>
    %16 = vector.extract_strided_slice %3 {offsets = [1, 0], sizes = [1, 128], strides = [1, 1]} : vector<3x128xf32> to vector<1x128xf32>
    %17 = vector.broadcast %15 : vector<128x1xf32> to vector<128x128xf32>
    %18 = vector.broadcast %16 : vector<1x128xf32> to vector<128x128xf32>
    %19 = arith.mulf %17, %18 : vector<128x128xf32>
    %20 = arith.addf %14, %19 : vector<128x128xf32>
    %21 = vector.extract_strided_slice %1 {offsets = [0, 2], sizes = [128, 1], strides = [1, 1]} : vector<128x3xf32> to vector<128x1xf32>
    %22 = vector.extract_strided_slice %3 {offsets = [2, 0], sizes = [1, 128], strides = [1, 1]} : vector<3x128xf32> to vector<1x128xf32>
    %23 = vector.broadcast %21 : vector<128x1xf32> to vector<128x128xf32>
    %24 = vector.broadcast %22 : vector<1x128xf32> to vector<128x128xf32>
    %25 = arith.mulf %23, %24 : vector<128x128xf32>
    %26 = arith.addf %20, %25 : vector<128x128xf32>
    %27 = vector.broadcast %6 : vector<128x1xf32> to vector<128x128xf32>
    %28 = vector.broadcast %9 : vector<1x128xf32> to vector<128x128xf32>
    %29 = arith.addf %27, %28 : vector<128x128xf32>
    %cst_6 = arith.constant 2.000000e+00 : f32
    %30 = vector.broadcast %cst_6 : f32 to vector<128x128xf32>
    %31 = arith.mulf %30, %26 : vector<128x128xf32>
    %32 = arith.subf %29, %31 : vector<128x128xf32>
    %c0_7 = arith.constant 0 : index
    %c0_8 = arith.constant 0 : index
    %c0_9 = arith.constant 0 : index
    %33 = vector.load %arg3[%c0_7, %c0_8, %c0_9] : memref<1x128x128xf32, #tpu.memory_space<vmem>>, vector<1x128x128xf32>
    %34 = vector.shape_cast %33 : vector<1x128x128xf32> to vector<128x128xf32>
    %35 = vector.shape_cast %32 : vector<128x128xf32> to vector<1x128x128xf32>
    tpu.vector_store %arg3[%c0_7, %c0_8, %c0_9], %35 {strides = array<i32>} : memref<1x128x128xf32, #tpu.memory_space<vmem>>, vector<1x128x128xf32>,
    return
  }
  func.func @transform_0(%arg0: i32) -> (i32, i32, i32) {
    %c0_i32 = arith.constant 0 : i32
    %c0_i32_0 = arith.constant 0 : i32
    %c0_i32_1 = arith.constant 0 : i32
    return %arg0, %c0_i32, %c0_i32_0 : i32, i32, i32
  }
  func.func @transform_1(%arg0: i32) -> (i32, i32, i32) {
    %c0_i32 = arith.constant 0 : i32
    %c0_i32_0 = arith.constant 0 : i32
    %c0_i32_1 = arith.constant 0 : i32
    return %arg0, %c0_i32, %c0_i32_0 : i32, i32, i32
  }
  func.func @transform_2(%arg0: i32) -> (i32, i32, i32) {
    %c0_i32 = arith.constant 0 : i32
    %c0_i32_0 = arith.constant 0 : i32
    %c0_i32_1 = arith.constant 0 : i32
    return %arg0, %c0_i32, %c0_i32_0 : i32, i32, i32
  }
}

</mosaic_0001>

<llo_original>
// kernel: tpu_custom_call.1
$region0: #{tpu_custom_call.1}
  #allocation0 [shape = 'u32[]', space=smem, size = 0x4, offset = 0x4, fixed_abs, tag = 'smem constant byte address 0x4 - core index']
  #allocation1 [shape = 'u32[72,128]{1,0:T(1,128)}', space=vmem, size = 0x9000, scoped, tag = 'internal scratch']
  %s0 = inlined_call_operand.vmem [shape: f32[2,128,3], index: 0, kind: input, shape index: {}]
  %s1 = inlined_call_operand.vmem [shape: f32[2,3,128], index: 1, kind: input, shape index: {}]
  %s2 = inlined_call_operand.hbm [shape: f32[2,128,128], index: 2, kind: output, shape index: {}]
  %s3 = sld [smem:[#allocation0]]
  $region41: #{tpu_custom_call.1} parent=0
    _
  %s5 = ssub.s32 1, %s3
  %s6 = scalar_select 0, %s5, %s3
  $region1: #{tpu_custom_call.1} parent=0
    #allocation2 [shape = 'u8[131072]{0}', space=vmem, size = 0x20000, scoped, tag = 'output window, operand 0']
    #allocation3 [shape = 's32[2]{0}', space=sflag, size = 0x8, scoped, tag = 'scoped memory for tpu_custom_call.1']
    %7 = vsyncpa [#allocation3], 0
    %s8 = scalar_lea.sflag [#allocation3], 1
    %9 = vsyncpa %s8, 0
    loop: start=0, step=1, limit=4
    $region2: #{tpu_custom_call.1} parent=1 // loop_pre_header
      _
    $region3: #{tpu_custom_call.1} parent=1 // loop_header
      %s11 = sphi 0, %s15
      %p12 = scmp.ge.s32.totalorder %s11, 4
      %s21 = sphi 0, %s23
      %s24 = sphi 0, %s21
      %s25 = sphi 0, %s24
      %s41 = sphi 0, %s25
      %s47 = sphi 0, %s49
      %s50 = sphi 0, %s47
      %s51 = sphi 0, %s50
      %s67 = sphi 0, %s51
      %s73 = sphi 0, %s75
      %s76 = sphi 0, %s73
      %s77 = sphi 0, %s76
      %s93 = sphi 0, %s77
    $region4: #{tpu_custom_call.1} parent=1 // loop_header_branch
      %14 = sbr.rel (%p12) target = $region8
    $region5: #{tpu_custom_call.1} parent=1 // loop_body
      %s16 = ssub.s32 %s11, 1
      %s17 = ssub.s32 %s11, 2
      %s18 = sadd.s32 %s11, 1
      %s19 = ssub.s32 %s11, %s18
      %p20 = scmp.eq.s32.totalorder %s19, 0
      %s22 = sadd.s32 %s21, 1
      %s23 = scalar_select %p20, %s21, %s22
      %p26 = pneg %p20
      %p27 = scmp.eq.s32.totalorder %s11, 1
      %p28 = por %p26, %p27
      %p29 = scmp.ne.s32.totalorder %s21, %s24
      %p30 = scmp.eq.s32.totalorder %s11, 0
      %p31 = por %p29, %p30
      %p32 = scmp.ne.s32.totalorder %s21, %s24
      %p33 = scmp.eq.s32.totalorder %s16, 1
      %p34 = por %p32, %p33
      %p35 = scmp.ne.s32.totalorder %s24, %s25
      %p36 = scmp.eq.s32.totalorder %s16, 0
      %p37 = por %p35, %p36
      %p38 = scmp.ne.s32.totalorder %s24, %s25
      %p39 = scmp.eq.s32.totalorder %s17, 1
      %p40 = por %p38, %p39
      %p42 = scmp.ne.s32.totalorder %s25, %s41
      %p43 = scmp.eq.s32.totalorder %s17, 0
      %p44 = por %p42, %p43
      %s45 = ssub.s32 %s11, %s18
      %p46 = scmp.eq.s32.totalorder %s45, 0
      %s48 = sadd.s32 %s47, 1
      %s49 = scalar_select %p46, %s47, %s48
      %p52 = pneg %p46
      %p53 = scmp.eq.s32.totalorder %s11, 1
      %p54 = por %p52, %p53
      %p55 = scmp.ne.s32.totalorder %s47, %s50
      %p56 = scmp.eq.s32.totalorder %s11, 0
      %p57 = por %p55, %p56
      %p58 = scmp.ne.s32.totalorder %s47, %s50
      %p59 = scmp.eq.s32.totalorder %s16, 1
      %p60 = por %p58, %p59
      %p61 = scmp.ne.s32.totalorder %s50, %s51
      %p62 = scmp.eq.s32.totalorder %s16, 0
      %p63 = por %p61, %p62
      %p64 = scmp.ne.s32.totalorder %s50, %s51
      %p65 = scmp.eq.s32.totalorder %s17, 1
      %p66 = por %p64, %p65
      %p68 = scmp.ne.s32.totalorder %s51, %s67
      %p69 = scmp.eq.s32.totalorder %s17, 0
      %p70 = por %p68, %p69
      %s71 = ssub.s32 %s11, %s18
      %p72 = scmp.eq.s32.totalorder %s71, 0
      %s74 = sadd.s32 %s73, 1
      %s75 = scalar_select %p72, %s73, %s74
      %p78 = pneg %p72
      %p79 = scmp.eq.s32.totalorder %s11, 1
      %p80 = por %p78, %p79
      %p81 = scmp.ne.s32.totalorder %s73, %s76
      %p82 = scmp.eq.s32.totalorder %s11, 0
      %p83 = por %p81, %p82
      %p84 = scmp.ne.s32.totalorder %s73, %s76
      %p85 = scmp.eq.s32.totalorder %s16, 1
      %p86 = por %p84, %p85
      %p87 = scmp.ne.s32.totalorder %s76, %s77
      %p88 = scmp.eq.s32.totalorder %s16, 0
      %p89 = por %p87, %p88
      %p90 = scmp.ne.s32.totalorder %s76, %s77
      %p91 = scmp.eq.s32.totalorder %s17, 1
      %p92 = por %p90, %p91
      %p94 = scmp.ne.s32.totalorder %s77, %s93
      %p95 = scmp.eq.s32.totalorder %s17, 0
      %p96 = por %p94, %p95
      %p97 = scmp.le.s32.totalorder 1, %s11
      %p98 = scmp.lt.s32.totalorder %s11, 3
      %p99 = pnand %p97, %p98
      %p100 = pneg %p99
      // Predicated region
      $region9: #{tpu_custom_call.1} parent=5 // pred_check
        _
      $region10: #{tpu_custom_call.1} parent=5 // pred_check_branch
        %102 = sbr.rel (%p99) target = $region12
      $region11: #{tpu_custom_call.1} parent=5 // pred_region
        %s103 = ssub.s32 %s11, 1
      $region12: #{tpu_custom_call.1} parent=5 // pred_fallthru
        _
      %p104 = scmp.lt.s32.totalorder %s11, 2
      // Predicated region
      $region13: #{tpu_custom_call.1} parent=5 // pred_check
        %p105 = pneg %p104
      $region14: #{tpu_custom_call.1} parent=5 // pred_check_branch
        %107 = sbr.rel (%p105) target = $region16
      $region15: #{tpu_custom_call.1} parent=5 // pred_region
        // Predicated region
        $region17: #{tpu_custom_call.1} parent=15 // pred_check
          %p108 = pneg %p31
        $region18: #{tpu_custom_call.1} parent=15 // pred_check_branch
          %110 = sbr.rel (%p108) target = $region20
        $region19: #{tpu_custom_call.1} parent=15 // pred_region
          %p111 = scmp.lt.s32.totalorder %s11, 1
          %s112 = scalar_select %p111, %s11, 1
          %s113 = smul.addr %s112, 16
          %s114 = smul.addr %s113, 8
          %s115 = scalar_lea.vmem %s0, %s114
        $region20: #{tpu_custom_call.1} parent=15 // pred_fallthru
          _
        // Predicated region
        $region21: #{tpu_custom_call.1} parent=15 // pred_check
          %p116 = pneg %p57
        $region22: #{tpu_custom_call.1} parent=15 // pred_check_branch
          %118 = sbr.rel (%p116) target = $region24
        $region23: #{tpu_custom_call.1} parent=15 // pred_region
          %p119 = scmp.lt.s32.totalorder %s11, 1
          %s120 = scalar_select %p119, %s11, 1
          %s121 = smul.addr %s120, 4
          %s122 = scalar_lea.vmem %s1, %s121
        $region24: #{tpu_custom_call.1} parent=15 // pred_fallthru
          _
      $region16: #{tpu_custom_call.1} parent=5 // pred_fallthru
        _
      %p123 = scmp.le.s32.totalorder 1, %s11
      %p124 = scmp.lt.s32.totalorder %s11, 3
      %p125 = pnand %p123, %p124
      %p126 = pneg %p125
      // Predicated region
      $region25: #{tpu_custom_call.1} parent=5 // pred_check
        _
      $region26: #{tpu_custom_call.1} parent=5 // pred_check_branch
        %128 = sbr.rel (%p125) target = $region28
      $region27: #{tpu_custom_call.1} parent=5 // pred_region
        %s129 = ssub.s32 %s11, 1
        %p130 = scmp.lt.s32.totalorder %s16, 1
        %s131 = scalar_select %p130, %s16, 1
        %s132 = smul.addr %s131, 16
        %s133 = smul.addr %s132, 8
        %s134 = scalar_lea.vmem %s0, %s133
        %p135 = pneg %p37
        %p136 = pneg %p34
        %p137 = scmp.lt.s32.totalorder %s16, 1
        %s138 = scalar_select %p137, %s16, 1
        %s139 = smul.addr %s138, 4
        %s140 = scalar_lea.vmem %s1, %s139
        %p141 = pneg %p63
        %p142 = pneg %p60
        %p143 = pneg %p89
        %p144 = pneg %p86
        %s145 = sand.u32 %s76, 1
        %s146 = scalar_lea.sflag [#allocation3], %s145
        %s147 = sand.u32 %s76, 1
        %s148 = smul.addr %s147, 128
        %s149 = scalar_lea.vmem [#allocation2], %s148
        %p150 = scmp.lt.s32.totalorder %s16, 1
        %s151 = scalar_select %p150, %s16, 1
        %s152 = smul.addr %s151, 16
        %s153 = smul.addr %s152, 8
        %s154 = scalar_lea.vmem %s0, %s153
        %p155 = scmp.lt.s32.totalorder %s16, 1
        %s156 = scalar_select %p155, %s16, 1
        %s157 = smul.addr %s156, 4
        %s158 = scalar_lea.vmem %s1, %s157
        %v159 = vld [vmem:[%s154] sm:$0xff]
        %v160 = vld [vmem:[%s154 + $0x8] sm:$0xff]
        %v161 = vld [vmem:[%s154 + $0x10] sm:$0xff]
        %v162 = vld [vmem:[%s154 + $0x18] sm:$0xff]
        %v163 = vld [vmem:[%s154 + $0x20] sm:$0xff]
        %v164 = vld [vmem:[%s154 + $0x28] sm:$0xff]
        %v165 = vld [vmem:[%s154 + $0x30] sm:$0xff]
        %v166 = vld [vmem:[%s154 + $0x38] sm:$0xff]
        %v167 = vld [vmem:[%s154 + $0x40] sm:$0xff]
        %v168 = vld [vmem:[%s154 + $0x48] sm:$0xff]
        %v169 = vld [vmem:[%s154 + $0x50] sm:$0xff]
        %v170 = vld [vmem:[%s154 + $0x58] sm:$0xff]
        %v171 = vld [vmem:[%s154 + $0x60] sm:$0xff]
        %v172 = vld [vmem:[%s154 + $0x68] sm:$0xff]
        %v173 = vld [vmem:[%s154 + $0x70] sm:$0xff]
        %v174 = vld [vmem:[%s154 + $0x78] sm:$0xff]
        %v175 = vld [vmem:[%s158] sm:$0x7]
        %v176 = vmul.f32 %v159, %v159
        %v177 = vmul.f32 %v160, %v160
        %v178 = vmul.f32 %v161, %v161
        %v179 = vmul.f32 %v162, %v162
        %v180 = vmul.f32 %v163, %v163
        %v181 = vmul.f32 %v164, %v164
        %v182 = vmul.f32 %v165, %v165
        %v183 = vmul.f32 %v166, %v166
        %v184 = vmul.f32 %v167, %v167
        %v185 = vmul.f32 %v168, %v168
        %v186 = vmul.f32 %v169, %v169
        %v187 = vmul.f32 %v170, %v170
        %v188 = vmul.f32 %v171, %v171
        %v189 = vmul.f32 %v172, %v172
        %v190 = vmul.f32 %v173, %v173
        %v191 = vmul.f32 %v174, %v174
        %vm192 = vcmask 23552
        %v193 = vsel %vm192, %v176, 0.0
        %194 = vadd.xlane.f32.xlu0 %v193
        %v195 = vpop.xlane.xlu0 %194
        %v196 = vsel %vm192, %v177, 0.0
        %197 = vadd.xlane.f32.xlu0 %v196
        %v198 = vpop.xlane.xlu0 %197
        %v199 = vsel %vm192, %v178, 0.0
        %200 = vadd.xlane.f32.xlu0 %v199
        %v201 = vpop.xlane.xlu0 %200
        %v202 = vsel %vm192, %v179, 0.0
        %203 = vadd.xlane.f32.xlu0 %v202
        %v204 = vpop.xlane.xlu0 %203
        %v205 = vsel %vm192, %v180, 0.0
        %206 = vadd.xlane.f32.xlu0 %v205
        %v207 = vpop.xlane.xlu0 %206
        %v208 = vsel %vm192, %v181, 0.0
        %209 = vadd.xlane.f32.xlu0 %v208
        %v210 = vpop.xlane.xlu0 %209
        %v211 = vsel %vm192, %v182, 0.0
        %212 = vadd.xlane.f32.xlu0 %v211
        %v213 = vpop.xlane.xlu0 %212
        %v214 = vsel %vm192, %v183, 0.0
        %215 = vadd.xlane.f32.xlu0 %v214
        %v216 = vpop.xlane.xlu0 %215
        %v217 = vsel %vm192, %v184, 0.0
        %218 = vadd.xlane.f32.xlu0 %v217
        %v219 = vpop.xlane.xlu0 %218
        %v220 = vsel %vm192, %v185, 0.0
        %221 = vadd.xlane.f32.xlu0 %v220
        %v222 = vpop.xlane.xlu0 %221
        %v223 = vsel %vm192, %v186, 0.0
        %224 = vadd.xlane.f32.xlu0 %v223
        %v225 = vpop.xlane.xlu0 %224
        %v226 = vsel %vm192, %v187, 0.0
        %227 = vadd.xlane.f32.xlu0 %v226
        %v228 = vpop.xlane.xlu0 %227
        %v229 = vsel %vm192, %v188, 0.0
        %230 = vadd.xlane.f32.xlu0 %v229
        %v231 = vpop.xlane.xlu0 %230
        %v232 = vsel %vm192, %v189, 0.0
        %233 = vadd.xlane.f32.xlu0 %v232
        %v234 = vpop.xlane.xlu0 %233
        %v235 = vsel %vm192, %v190, 0.0
        %236 = vadd.xlane.f32.xlu0 %v235
        %v237 = vpop.xlane.xlu0 %236
        %v238 = vsel %vm192, %v191, 0.0
        %239 = vadd.xlane.f32.xlu0 %v238
        %v240 = vpop.xlane.xlu0 %239
        %v241 = vmul.f32 %v175, %v175
        %vm242 = vcmask 1042432
        %v243 = vsel %vm242, %v241, 0.0
        %v244 = vrot.slane %v243, 4
        %v245 = vadd.f32 %v243, %v244
        %v246 = vrot.slane %v245, 2
        %v247 = vadd.f32 %v245, %v246
        %v248 = vrot.slane %v247, 1
        %v249 = vadd.f32 %v247, %v248
        %251 = vset.pattern.permute.xlu0 0
        %252 = vperm.xlu0 %251, %v159
        %v253 = vpop.permute.xlu0 %252
        %256 = vset.pattern.permute.xlu0 0
        %257 = vperm.xlu0 %256, %v160
        %v258 = vpop.permute.xlu0 %257
        %261 = vset.pattern.permute.xlu0 0
        %262 = vperm.xlu0 %261, %v161
        %v263 = vpop.permute.xlu0 %262
        %266 = vset.pattern.permute.xlu0 0
        %267 = vperm.xlu0 %266, %v162
        %v268 = vpop.permute.xlu0 %267
        %271 = vset.pattern.permute.xlu0 0
        %272 = vperm.xlu0 %271, %v163
        %v273 = vpop.permute.xlu0 %272
        %276 = vset.pattern.permute.xlu0 0
        %277 = vperm.xlu0 %276, %v164
        %v278 = vpop.permute.xlu0 %277
        %281 = vset.pattern.permute.xlu0 0
        %282 = vperm.xlu0 %281, %v165
        %v283 = vpop.permute.xlu0 %282
        %286 = vset.pattern.permute.xlu0 0
        %287 = vperm.xlu0 %286, %v166
        %v288 = vpop.permute.xlu0 %287
        %291 = vset.pattern.permute.xlu0 0
        %292 = vperm.xlu0 %291, %v167
        %v293 = vpop.permute.xlu0 %292
        %296 = vset.pattern.permute.xlu0 0
        %297 = vperm.xlu0 %296, %v168
        %v298 = vpop.permute.xlu0 %297
        %301 = vset.pattern.permute.xlu0 0
        %302 = vperm.xlu0 %301, %v169
        %v303 = vpop.permute.xlu0 %302
        %306 = vset.pattern.permute.xlu0 0
        %307 = vperm.xlu0 %306, %v170
        %v308 = vpop.permute.xlu0 %307
        %311 = vset.pattern.permute.xlu0 0
        %312 = vperm.xlu0 %311, %v171
        %v313 = vpop.permute.xlu0 %312
        %316 = vset.pattern.permute.xlu0 0
        %317 = vperm.xlu0 %316, %v172
        %v318 = vpop.permute.xlu0 %317
        %321 = vset.pattern.permute.xlu0 0
        %322 = vperm.xlu0 %321, %v173
        %v323 = vpop.permute.xlu0 %322
        %326 = vset.pattern.permute.xlu0 0
        %327 = vperm.xlu0 %326, %v174
        %v328 = vpop.permute.xlu0 %327
        %v330 = vperm.slane %v175, 0
        %v331 = vmul.f32 %v253, %v330
        %v332 = vmul.f32 %v258, %v330
        %v333 = vmul.f32 %v263, %v330
        %v334 = vmul.f32 %v268, %v330
        %v335 = vmul.f32 %v273, %v330
        %v336 = vmul.f32 %v278, %v330
        %v337 = vmul.f32 %v283, %v330
        %v338 = vmul.f32 %v288, %v330
        %v339 = vmul.f32 %v293, %v330
        %v340 = vmul.f32 %v298, %v330
        %v341 = vmul.f32 %v303, %v330
        %v342 = vmul.f32 %v308, %v330
        %v343 = vmul.f32 %v313, %v330
        %v344 = vmul.f32 %v318, %v330
        %v345 = vmul.f32 %v323, %v330
        %v346 = vmul.f32 %v328, %v330
        %347 = vset.pattern.permute.xlu0 1
        %348 = vperm.xlu0 %347, %v159
        %v349 = vpop.permute.xlu0 %348
        %351 = vset.pattern.permute.xlu0 1
        %352 = vperm.xlu0 %351, %v160
        %v353 = vpop.permute.xlu0 %352
        %355 = vset.pattern.permute.xlu0 1
        %356 = vperm.xlu0 %355, %v161
        %v357 = vpop.permute.xlu0 %356
        %359 = vset.pattern.permute.xlu0 1
        %360 = vperm.xlu0 %359, %v162
        %v361 = vpop.permute.xlu0 %360
        %363 = vset.pattern.permute.xlu0 1
        %364 = vperm.xlu0 %363, %v163
        %v365 = vpop.permute.xlu0 %364
        %367 = vset.pattern.permute.xlu0 1
        %368 = vperm.xlu0 %367, %v164
        %v369 = vpop.permute.xlu0 %368
        %371 = vset.pattern.permute.xlu0 1
        %372 = vperm.xlu0 %371, %v165
        %v373 = vpop.permute.xlu0 %372
        %375 = vset.pattern.permute.xlu0 1
        %376 = vperm.xlu0 %375, %v166
        %v377 = vpop.permute.xlu0 %376
        %379 = vset.pattern.permute.xlu0 1
        %380 = vperm.xlu0 %379, %v167
        %v381 = vpop.permute.xlu0 %380
        %383 = vset.pattern.permute.xlu0 1
        %384 = vperm.xlu0 %383, %v168
        %v385 = vpop.permute.xlu0 %384
        %387 = vset.pattern.permute.xlu0 1
        %388 = vperm.xlu0 %387, %v169
        %v389 = vpop.permute.xlu0 %388
        %391 = vset.pattern.permute.xlu0 1
        %392 = vperm.xlu0 %391, %v170
        %v393 = vpop.permute.xlu0 %392
        %395 = vset.pattern.permute.xlu0 1
        %396 = vperm.xlu0 %395, %v171
        %v397 = vpop.permute.xlu0 %396
        %399 = vset.pattern.permute.xlu0 1
        %400 = vperm.xlu0 %399, %v172
        %v401 = vpop.permute.xlu0 %400
        %403 = vset.pattern.permute.xlu0 1
        %404 = vperm.xlu0 %403, %v173
        %v405 = vpop.permute.xlu0 %404
        %407 = vset.pattern.permute.xlu0 1
        %408 = vperm.xlu0 %407, %v174
        %v409 = vpop.permute.xlu0 %408
        %v411 = vperm.slane %v175, 1
        %v412 = vmul.f32 %v349, %v411
        %v413 = vmul.f32 %v353, %v411
        %v414 = vmul.f32 %v357, %v411
        %v415 = vmul.f32 %v361, %v411
        %v416 = vmul.f32 %v365, %v411
        %v417 = vmul.f32 %v369, %v411
        %v418 = vmul.f32 %v373, %v411
        %v419 = vmul.f32 %v377, %v411
        %v420 = vmul.f32 %v381, %v411
        %v421 = vmul.f32 %v385, %v411
        %v422 = vmul.f32 %v389, %v411
        %v423 = vmul.f32 %v393, %v411
        %v424 = vmul.f32 %v397, %v411
        %v425 = vmul.f32 %v401, %v411
        %v426 = vmul.f32 %v405, %v411
        %v427 = vmul.f32 %v409, %v411
        %v428 = vadd.f32 %v331, %v412
        %v429 = vadd.f32 %v332, %v413
        %v430 = vadd.f32 %v333, %v414
        %v431 = vadd.f32 %v334, %v415
        %v432 = vadd.f32 %v335, %v416
        %v433 = vadd.f32 %v336, %v417
        %v434 = vadd.f32 %v337, %v418
        %v435 = vadd.f32 %v338, %v419
        %v436 = vadd.f32 %v339, %v420
        %v437 = vadd.f32 %v340, %v421
        %v438 = vadd.f32 %v341, %v422
        %v439 = vadd.f32 %v342, %v423
        %v440 = vadd.f32 %v343, %v424
        %v441 = vadd.f32 %v344, %v425
        %v442 = vadd.f32 %v345, %v426
        %v443 = vadd.f32 %v346, %v427
        %444 = vset.pattern.permute.xlu0 2
        %445 = vperm.xlu0 %444, %v159
        %v446 = vpop.permute.xlu0 %445
        %448 = vset.pattern.permute.xlu0 2
        %449 = vperm.xlu0 %448, %v160
        %v450 = vpop.permute.xlu0 %449
        %452 = vset.pattern.permute.xlu0 2
        %453 = vperm.xlu0 %452, %v161
        %v454 = vpop.permute.xlu0 %453
        %456 = vset.pattern.permute.xlu0 2
        %457 = vperm.xlu0 %456, %v162
        %v458 = vpop.permute.xlu0 %457
        %460 = vset.pattern.permute.xlu0 2
        %461 = vperm.xlu0 %460, %v163
        %v462 = vpop.permute.xlu0 %461
        %464 = vset.pattern.permute.xlu0 2
        %465 = vperm.xlu0 %464, %v164
        %v466 = vpop.permute.xlu0 %465
        %468 = vset.pattern.permute.xlu0 2
        %469 = vperm.xlu0 %468, %v165
        %v470 = vpop.permute.xlu0 %469
        %472 = vset.pattern.permute.xlu0 2
        %473 = vperm.xlu0 %472, %v166
        %v474 = vpop.permute.xlu0 %473
        %476 = vset.pattern.permute.xlu0 2
        %477 = vperm.xlu0 %476, %v167
        %v478 = vpop.permute.xlu0 %477
        %480 = vset.pattern.permute.xlu0 2
        %481 = vperm.xlu0 %480, %v168
        %v482 = vpop.permute.xlu0 %481
        %484 = vset.pattern.permute.xlu0 2
        %485 = vperm.xlu0 %484, %v169
        %v486 = vpop.permute.xlu0 %485
        %488 = vset.pattern.permute.xlu0 2
        %489 = vperm.xlu0 %488, %v170
        %v490 = vpop.permute.xlu0 %489
        %492 = vset.pattern.permute.xlu0 2
        %493 = vperm.xlu0 %492, %v171
        %v494 = vpop.permute.xlu0 %493
        %496 = vset.pattern.permute.xlu0 2
        %497 = vperm.xlu0 %496, %v172
        %v498 = vpop.permute.xlu0 %497
        %500 = vset.pattern.permute.xlu0 2
        %501 = vperm.xlu0 %500, %v173
        %v502 = vpop.permute.xlu0 %501
        %504 = vset.pattern.permute.xlu0 2
        %505 = vperm.xlu0 %504, %v174
        %v506 = vpop.permute.xlu0 %505
        %v508 = vperm.slane %v175, 2
        %v509 = vmul.f32 %v446, %v508
        %v510 = vmul.f32 %v450, %v508
        %v511 = vmul.f32 %v454, %v508
        %v512 = vmul.f32 %v458, %v508
        %v513 = vmul.f32 %v462, %v508
        %v514 = vmul.f32 %v466, %v508
        %v515 = vmul.f32 %v470, %v508
        %v516 = vmul.f32 %v474, %v508
        %v517 = vmul.f32 %v478, %v508
        %v518 = vmul.f32 %v482, %v508
        %v519 = vmul.f32 %v486, %v508
        %v520 = vmul.f32 %v490, %v508
        %v521 = vmul.f32 %v494, %v508
        %v522 = vmul.f32 %v498, %v508
        %v523 = vmul.f32 %v502, %v508
        %v524 = vmul.f32 %v506, %v508
        %v525 = vadd.f32 %v428, %v509
        %v526 = vadd.f32 %v429, %v510
        %v527 = vadd.f32 %v430, %v511
        %v528 = vadd.f32 %v431, %v512
        %v529 = vadd.f32 %v432, %v513
        %v530 = vadd.f32 %v433, %v514
        %v531 = vadd.f32 %v434, %v515
        %v532 = vadd.f32 %v435, %v516
        %v533 = vadd.f32 %v436, %v517
        %v534 = vadd.f32 %v437, %v518
        %v535 = vadd.f32 %v438, %v519
        %v536 = vadd.f32 %v439, %v520
        %v537 = vadd.f32 %v440, %v521
        %v538 = vadd.f32 %v441, %v522
        %v539 = vadd.f32 %v442, %v523
        %v540 = vadd.f32 %v443, %v524
        %v541 = vadd.f32 %v195, %v249
        %v542 = vadd.f32 %v198, %v249
        %v543 = vadd.f32 %v201, %v249
        %v544 = vadd.f32 %v204, %v249
        %v545 = vadd.f32 %v207, %v249
        %v546 = vadd.f32 %v210, %v249
        %v547 = vadd.f32 %v213, %v249
        %v548 = vadd.f32 %v216, %v249
        %v549 = vadd.f32 %v219, %v249
        %v550 = vadd.f32 %v222, %v249
        %v551 = vadd.f32 %v225, %v249
        %v552 = vadd.f32 %v228, %v249
        %v553 = vadd.f32 %v231, %v249
        %v554 = vadd.f32 %v234, %v249
        %v555 = vadd.f32 %v237, %v249
        %v556 = vadd.f32 %v240, %v249
        %v557 = vmul.f32 %v525, 2.0
        %v558 = vmul.f32 %v526, 2.0
        %v559 = vmul.f32 %v527, 2.0
        %v560 = vmul.f32 %v528, 2.0
        %v561 = vmul.f32 %v529, 2.0
        %v562 = vmul.f32 %v530, 2.0
        %v563 = vmul.f32 %v531, 2.0
        %v564 = vmul.f32 %v532, 2.0
        %v565 = vmul.f32 %v533, 2.0
        %v566 = vmul.f32 %v534, 2.0
        %v567 = vmul.f32 %v535, 2.0
        %v568 = vmul.f32 %v536, 2.0
        %v569 = vmul.f32 %v537, 2.0
        %v570 = vmul.f32 %v538, 2.0
        %v571 = vmul.f32 %v539, 2.0
        %v572 = vmul.f32 %v540, 2.0
        %v573 = vsub.f32 %v541, %v557
        %v574 = vsub.f32 %v542, %v558
        %v575 = vsub.f32 %v543, %v559
        %v576 = vsub.f32 %v544, %v560
        %v577 = vsub.f32 %v545, %v561
        %v578 = vsub.f32 %v546, %v562
        %v579 = vsub.f32 %v547, %v563
        %v580 = vsub.f32 %v548, %v564
        %v581 = vsub.f32 %v549, %v565
        %v582 = vsub.f32 %v550, %v566
        %v583 = vsub.f32 %v551, %v567
        %v584 = vsub.f32 %v552, %v568
        %v585 = vsub.f32 %v553, %v569
        %v586 = vsub.f32 %v554, %v570
        %v587 = vsub.f32 %v555, %v571
        %v588 = vsub.f32 %v556, %v572
        %589 = vst [vmem:[%s149] sm:$0xff] %v573
        %590 = vst [vmem:[%s149 + $0x8] sm:$0xff] %v574
        %591 = vst [vmem:[%s149 + $0x10] sm:$0xff] %v575
        %592 = vst [vmem:[%s149 + $0x18] sm:$0xff] %v576
        %593 = vst [vmem:[%s149 + $0x20] sm:$0xff] %v577
        %594 = vst [vmem:[%s149 + $0x28] sm:$0xff] %v578
        %595 = vst [vmem:[%s149 + $0x30] sm:$0xff] %v579
        %596 = vst [vmem:[%s149 + $0x38] sm:$0xff] %v580
        %597 = vst [vmem:[%s149 + $0x40] sm:$0xff] %v581
        %598 = vst [vmem:[%s149 + $0x48] sm:$0xff] %v582
        %599 = vst [vmem:[%s149 + $0x50] sm:$0xff] %v583
        %600 = vst [vmem:[%s149 + $0x58] sm:$0xff] %v584
        %601 = vst [vmem:[%s149 + $0x60] sm:$0xff] %v585
        %602 = vst [vmem:[%s149 + $0x68] sm:$0xff] %v586
        %603 = vst [vmem:[%s149 + $0x70] sm:$0xff] %v587
        %604 = vst [vmem:[%s149 + $0x78] sm:$0xff] %v588
        %s605 = sand.u32 %s76, 1
        %s606 = scalar_lea.sflag [#allocation3], %s605
        %s607 = sand.u32 %s76, 1
        %s608 = smul.addr %s607, 128
        %s609 = scalar_lea.vmem [#allocation2], %s608
        // Predicated region
        $region29: #{tpu_custom_call.1} parent=27 // pred_check
          %p610 = pneg %p86
        $region30: #{tpu_custom_call.1} parent=27 // pred_check_branch
          %612 = sbr.rel (%p610) target = $region32
        $region31: #{tpu_custom_call.1} parent=27 // pred_region
          %614 = vsyncadd %s606, 0
          %s615 = smul.addr %s16, 16
          %s616 = smul.addr %s615, 8
          %s617 = scalar_lea.hbm %s2, %s616
          %s618 = sshll.u32 %s609, 4
          %s619 = int_to_ptr.vmem [resolvable:$true] %s618
          %s620 = sshll.u32 %s617, 4
          %s621 = int_to_ptr.hbm [resolvable:$true] %s620
          %626 = dma.vmem_to_hbm [thread:$0]  %s619, 2048, %s621, %s606, 128, 128, 8
        $region32: #{tpu_custom_call.1} parent=27 // pred_fallthru
          _
      $region28: #{tpu_custom_call.1} parent=5 // pred_fallthru
        _
      %p627 = scmp.le.s32.totalorder 2, %s11
      // Predicated region
      $region33: #{tpu_custom_call.1} parent=5 // pred_check
        %p628 = pneg %p627
      $region34: #{tpu_custom_call.1} parent=5 // pred_check_branch
        %630 = sbr.rel (%p628) target = $region36
      $region35: #{tpu_custom_call.1} parent=5 // pred_region
        %s631 = ssub.s32 %s11, 2
        // Predicated region
        $region37: #{tpu_custom_call.1} parent=35 // pred_check
          %p632 = pneg %p92
        $region38: #{tpu_custom_call.1} parent=35 // pred_check_branch
          %634 = sbr.rel (%p632) target = $region40
        $region39: #{tpu_custom_call.1} parent=35 // pred_region
          %s635 = sand.u32 %s77, 1
          %s636 = scalar_lea.sflag [#allocation3], %s635
          %s637 = sand.u32 %s77, 1
          %s638 = smul.addr %s637, 128
          %s639 = scalar_lea.vmem [#allocation2], %s638
          %641 = dma.done %s636, 2048
        $region40: #{tpu_custom_call.1} parent=35 // pred_fallthru
          _
      $region36: #{tpu_custom_call.1} parent=5 // pred_fallthru
        _
    $region6: #{tpu_custom_call.1} parent=1 // loop_footer
      %s15 = sadd.s32 1, %s11
    $region7: #{tpu_custom_call.1} parent=1 // loop_footer_branch
      %10 = sbr.rel target = $region3
    $region8: #{tpu_custom_call.1} parent=1 // loop_exit
      _
    %642 = vsyncpa [#allocation3], 1
    %s643 = scalar_lea.sflag [#allocation3], 1
    %644 = vsyncpa %s643, 1

</llo_original>
